<compile_context>
chip_gen: v7x
topology: tpu7x:2x2x1
jax: 0.10.0
libtpu: 0.0.40
codegen_flags: <defaults>
</compile_context>

<pallas_src>
import functools

import jax
import jax.numpy as jnp
from jax.experimental import pallas as pl
from jax.experimental.pallas import tpu as pltpu


# --------------------------------------------------------------------------
# Kernel
# --------------------------------------------------------------------------
def patch_embed_kernel(patch_ref, w_ref, add_ref, out_ref):
    # patch_ref: (BB, T, K)  compute-dtype flattened patches; row 0 of every
    #                        image is all-zero (CLS slot), rows 1..N are patches.
    # w_ref:     (K, E)      compute-dtype flattened conv weight.
    # add_ref:   (T, E)      f32: row 0 = cls_token + pos_embed[0],
    #                             rows 1..N = conv_bias + pos_embed[1:].
    # out_ref:   (BB, T, E)  output block.
    BB = patch_ref.shape[0]
    w = w_ref[...]
    add = add_ref[...]
    for b in range(BB):  # static unroll; iterations are fully independent
        acc = jnp.dot(patch_ref[b], w, preferred_element_type=jnp.float32)
        out_ref[b] = (acc + add).astype(out_ref.dtype)  # one aligned slab store


# --------------------------------------------------------------------------
# Sizing helpers
# --------------------------------------------------------------------------
def _vmem_capacity_bytes():
    try:
        return int(pltpu.get_tpu_info().vmem_capacity_bytes)
    except Exception:
        return 64 << 20  # conservative (v7x-sized) fallback


def _pick_block_batch(B, per_image_bytes, budget_bytes, prefer_even_steps,
                      max_bb=32):
    """Largest divisor BB of B whose pipelined blocks fit the VMEM budget.

    On 2-TensorCore chips prefer an even number of grid steps so both cores
    get equal work under dimension_semantics=("parallel",).  max_bb bounds the
    static unroll inside the kernel."""
    fits = [d for d in range(1, min(B, max_bb) + 1)
            if B % d == 0 and d * per_image_bytes <= budget_bytes]
    if not fits:
        return 1
    if prefer_even_steps and B >= 2:
        even = [d for d in fits if (B // d) % 2 == 0]
        if even:
            return max(even)
    return max(fits)


def _invariant_spec(shape):
    """Grid-invariant operand: constant index_map, single-buffered if supported."""
    index_map = lambda b: (0,) * len(shape)
    try:
        return pl.BlockSpec(shape, index_map, pipeline_mode=pl.Buffered(1))
    except (TypeError, AttributeError):  # older JAX without pipeline_mode
        return pl.BlockSpec(shape, index_map)


# --------------------------------------------------------------------------
# Wrapper
# --------------------------------------------------------------------------
def patch_embedding(x, conv_w, conv_b, cls_token, pos_embed, *, patch: int,
                    compute_dtype=jnp.bfloat16, out_dtype=None):
    """x: (B, C, H, W). conv_w: (E, C, P, P). conv_b: (E,).
    cls_token: (1, E). pos_embed: (N+1, E). Returns (B, N+1, E) in out_dtype
    (default x.dtype).  Inputs to the matmul are cast to compute_dtype
    (default bf16) with f32 MXU accumulation."""
    B, C, H, W = x.shape
    E = conv_w.shape[0]
    P = patch
    assert H % P == 0 and W % P == 0, "spatial dims must be divisible by patch"
    Hp, Wp = H // P, W // P
    N = Hp * Wp
    K = C * P * P
    T = N + 1
    out_dtype = x.dtype if out_dtype is None else jnp.dtype(out_dtype)

    # --- wrapper glue (one fused XLA producer): patch extraction + zero CLS
    # row + cast.  conv2d(stride=P) == (B,N,K) patches @ (K,E) weight.
    # TODO(synk): fuse this extraction into the kernel to drop the HBM pass.
    patches = x.reshape(B, C, Hp, P, Wp, P).transpose(0, 2, 4, 1, 3, 5)
    patches = patches.reshape(B, N, K)
    patches_ext = jnp.pad(patches, ((0, 0), (1, 0), (0, 0)))  # zero CLS row
    patches_ext = patches_ext.astype(compute_dtype)           # (B, T, K)

    w_flat = conv_w.reshape(E, K).T.astype(compute_dtype)     # (K, E)

    # Additive table covering all T rows, precomputed once in f32.
    add_all = jnp.concatenate(
        [cls_token + pos_embed[0:1],            # row 0:   cls + pos[0]
         pos_embed[1:] + conv_b[None, :]],      # rows 1+: bias + pos[1:]
        axis=0).astype(jnp.float32)             # (T, E)

    # --- generation-aware block sizing ---
    in_bytes = jnp.dtype(compute_dtype).itemsize
    out_bytes = jnp.dtype(out_dtype).itemsize
    # double-buffered patch block + double-buffered output block, per image
    per_image = 2 * (T * K * in_bytes + T * E * out_bytes)

    vmem_cap = _vmem_capacity_bytes()
    two_tc = vmem_cap < (100 << 20)        # v7x: 64 MiB/TC; v5e/v6e: 128 MiB
    block_budget = int(0.40 * vmem_cap)    # big blocks on 128 MiB chips
    BB = _pick_block_batch(B, per_image, block_budget, prefer_even_steps=two_tc)

    const_bytes = K * E * in_bytes + T * E * 4   # single-buffered weight+table
    vmem_limit = BB * per_image + const_bytes + (4 << 20)   # + margin
    vmem_limit = int(min(vmem_limit, vmem_cap - (8 << 20)))  # headroom on v7x
    vmem_limit = max(vmem_limit, 16 << 20)

    grid_spec = pltpu.PrefetchScalarGridSpec(
        num_scalar_prefetch=0,
        grid=(B // BB,),
        in_specs=[
            pl.BlockSpec((BB, T, K), lambda b: (b, 0, 0)),
            _invariant_spec((K, E)),
            _invariant_spec((T, E)),
        ],
        out_specs=pl.BlockSpec((BB, T, E), lambda b: (b, 0, 0)),
    )

    return pl.pallas_call(
        patch_embed_kernel,
        out_shape=jax.ShapeDtypeStruct((B, T, E), out_dtype),
        grid_spec=grid_spec,
        compiler_params=pltpu.CompilerParams(
            dimension_semantics=("parallel",),
            vmem_limit_bytes=vmem_limit),
    )(patches_ext, w_flat, add_all)


# --------------------------------------------------------------------------
# Pure-JAX reference reproducing the PyTorch forward
# --------------------------------------------------------------------------
def patch_embedding_ref(x, conv_w, conv_b, cls_token, pos_embed, *, patch: int,
                        quantize_inputs: bool = False):
    B, C, H, W = x.shape
    E = conv_w.shape[0]
    P = patch
    Hp, Wp = H // P, W // P
    N = Hp * Wp
    K = C * P * P
    patches = x.reshape(B, C, Hp, P, Wp, P).transpose(0, 2, 4, 1, 3, 5)
    patches = patches.reshape(B, N, K)
    w_flat = conv_w.reshape(E, K).T
    if quantize_inputs:  # mimic the kernel's bf16 inputs (f32 accumulation)
        patches = patches.astype(jnp.bfloat16).astype(jnp.float32)
        w_flat = w_flat.astype(jnp.bfloat16).astype(jnp.float32)
    out = jnp.einsum("bnk,ke->bne", patches, w_flat,
                     preferred_element_type=jnp.float32) + conv_b
    cls = jnp.broadcast_to(cls_token[None, :, :], (B, 1, E))
    out = jnp.concatenate([cls, out], axis=1)
    return (out + pos_embed[None, :, :]).astype(x.dtype)


# --------------------------------------------------------------------------
if __name__ == "__main__":
    # Small shapes consistent with the module (in_channels=C, embed_size=E,
    # in_size=H=W, patch size P, seq = (H/P)^2 + 1).  B=8 exercises batch
    # blocking (1 grid step on single-TC chips, 2 even steps on 2-TC chips).
    B, C, H = 8, 4, 16
    P = 4
    E = 128
    N = (H // P) ** 2  # 16 patches -> seq length 17

    key = jax.random.PRNGKey(0)
    kx, kw, kb, kc, kp = jax.random.split(key, 5)
    x = jax.random.normal(kx, (B, C, H, H), dtype=jnp.float32)
    conv_w = jax.random.normal(kw, (E, C, P, P), dtype=jnp.float32) * 0.05
    conv_b = jax.random.normal(kb, (E,), dtype=jnp.float32) * 0.05
    cls_token = jax.random.normal(kc, (1, E), dtype=jnp.float32)
    pos_embed = jax.random.normal(kp, (N + 1, E), dtype=jnp.float32)

    fn = jax.jit(functools.partial(patch_embedding, patch=P))
    out = jax.block_until_ready(fn(x, conv_w, conv_b, cls_token, pos_embed))
    assert out.shape == (B, N + 1, E), out.shape

    # Tight check vs a reference fed the same bf16-quantized inputs (validates
    # kernel plumbing), plus a looser check vs pure-f32 math (validates that
    # bf16 inputs + f32 accumulation stay within normal ViT tolerance).
    ref_q = patch_embedding_ref(x, conv_w, conv_b, cls_token, pos_embed,
                                patch=P, quantize_inputs=True)
    ref_f32 = patch_embedding_ref(x, conv_w, conv_b, cls_token, pos_embed,
                                  patch=P, quantize_inputs=False)
    assert jnp.allclose(out, ref_q, atol=2e-3, rtol=2e-3), \
        "mismatch vs bf16-input reference"
    assert jnp.allclose(out, ref_f32, atol=5e-2, rtol=5e-2), \
        "mismatch vs f32 reference"

    print("KERNEL_OK")
</pallas_src>

<mosaic_0001>
module attributes {stable_mosaic.version = 11 : i64} {
  func.func @patch_embed_kernel(%arg0: i32, %arg1: memref<4x17x64xbf16, #tpu.memory_space<vmem>>, %arg2: memref<64x128xbf16, #tpu.memory_space<vmem>>, %arg3: memref<17x128xf32, #tpu.memory_space<vmem>>, %arg4: memref<4x17x128xf32, #tpu.memory_space<vmem>>) attributes {dimension_semantics = [#tpu.dimension_semantics<parallel>], iteration_bounds = array<i64: 2>, scalar_prefetch = 0 : i64, scratch_operands = 0 : i64, tpu.core_type = #tpu.core_type<tc>, window_params = [{transform_indices = @transform_0, window_bounds = array<i64: 4, 17, 64>}, {pipeline_mode = #tpu.pipeline_mode<synchronous>, transform_indices = @transform_1, window_bounds = array<i64: 64, 128>}, {pipeline_mode = #tpu.pipeline_mode<synchronous>, transform_indices = @transform_2, window_bounds = array<i64: 17, 128>}, {transform_indices = @transform_3, window_bounds = array<i64: 4, 17, 128>}]} {
    %c0 = arith.constant 0 : index
    %c0_0 = arith.constant 0 : index
    %0 = vector.load %arg2[%c0, %c0_0] : memref<64x128xbf16, #tpu.memory_space<vmem>>, vector<64x128xbf16>
    %c0_1 = arith.constant 0 : index
    %c0_2 = arith.constant 0 : index
    %1 = vector.load %arg3[%c0_1, %c0_2] : memref<17x128xf32, #tpu.memory_space<vmem>>, vector<17x128xf32>
    %c0_3 = arith.constant 0 : index
    %c0_4 = arith.constant 0 : index
    %c0_5 = arith.constant 0 : index
    %2 = vector.load %arg1[%c0_3, %c0_4, %c0_5] : memref<4x17x64xbf16, #tpu.memory_space<vmem>>, vector<1x17x64xbf16>
    %3 = vector.shape_cast %2 : vector<1x17x64xbf16> to vector<17x64xbf16>
    %cst = arith.constant dense<0.000000e+00> : vector<17x128xf32>
    %4 = tpu.matmul %3, %0, %cst {dimension_numbers = #tpu.dot_dimension_numbers<[1], [0], [0], [1], [0, 0, 1, 1], [], []>} : vector<17x64xbf16>, vector<64x128xbf16>, vector<17x128xf32> -> vector<17x128xf32>
    %5 = arith.addf %4, %1 : vector<17x128xf32>
    %c0_6 = arith.constant 0 : index
    %c0_7 = arith.constant 0 : index
    %c0_8 = arith.constant 0 : index
    %6 = vector.load %arg4[%c0_6, %c0_7, %c0_8] : memref<4x17x128xf32, #tpu.memory_space<vmem>>, vector<1x17x128xf32>
    %7 = vector.shape_cast %6 : vector<1x17x128xf32> to vector<17x128xf32>
    %8 = vector.shape_cast %5 : vector<17x128xf32> to vector<1x17x128xf32>
    tpu.vector_store %arg4[%c0_6, %c0_7, %c0_8], %8 {strides = array<i32>} : memref<4x17x128xf32, #tpu.memory_space<vmem>>, vector<1x17x128xf32>,
    %c1 = arith.constant 1 : index
    %c0_9 = arith.constant 0 : index
    %c0_10 = arith.constant 0 : index
    %9 = vector.load %arg1[%c1, %c0_9, %c0_10] : memref<4x17x64xbf16, #tpu.memory_space<vmem>>, vector<1x17x64xbf16>
    %10 = vector.shape_cast %9 : vector<1x17x64xbf16> to vector<17x64xbf16>
    %cst_11 = arith.constant dense<0.000000e+00> : vector<17x128xf32>
    %11 = tpu.matmul %10, %0, %cst_11 {dimension_numbers = #tpu.dot_dimension_numbers<[1], [0], [0], [1], [0, 0, 1, 1], [], []>} : vector<17x64xbf16>, vector<64x128xbf16>, vector<17x128xf32> -> vector<17x128xf32>
    %12 = arith.addf %11, %1 : vector<17x128xf32>
    %c1_12 = arith.constant 1 : index
    %c0_13 = arith.constant 0 : index
    %c0_14 = arith.constant 0 : index
    %13 = vector.load %arg4[%c1_12, %c0_13, %c0_14] : memref<4x17x128xf32, #tpu.memory_space<vmem>>, vector<1x17x128xf32>
    %14 = vector.shape_cast %13 : vector<1x17x128xf32> to vector<17x128xf32>
    %15 = vector.shape_cast %12 : vector<17x128xf32> to vector<1x17x128xf32>
    tpu.vector_store %arg4[%c1_12, %c0_13, %c0_14], %15 {strides = array<i32>} : memref<4x17x128xf32, #tpu.memory_space<vmem>>, vector<1x17x128xf32>,
    %c2 = arith.constant 2 : index
    %c0_15 = arith.constant 0 : index
    %c0_16 = arith.constant 0 : index
    %16 = vector.load %arg1[%c2, %c0_15, %c0_16] : memref<4x17x64xbf16, #tpu.memory_space<vmem>>, vector<1x17x64xbf16>
    %17 = vector.shape_cast %16 : vector<1x17x64xbf16> to vector<17x64xbf16>
    %cst_17 = arith.constant dense<0.000000e+00> : vector<17x128xf32>
    %18 = tpu.matmul %17, %0, %cst_17 {dimension_numbers = #tpu.dot_dimension_numbers<[1], [0], [0], [1], [0, 0, 1, 1], [], []>} : vector<17x64xbf16>, vector<64x128xbf16>, vector<17x128xf32> -> vector<17x128xf32>
    %19 = arith.addf %18, %1 : vector<17x128xf32>
    %c2_18 = arith.constant 2 : index
    %c0_19 = arith.constant 0 : index
    %c0_20 = arith.constant 0 : index
    %20 = vector.load %arg4[%c2_18, %c0_19, %c0_20] : memref<4x17x128xf32, #tpu.memory_space<vmem>>, vector<1x17x128xf32>
    %21 = vector.shape_cast %20 : vector<1x17x128xf32> to vector<17x128xf32>
    %22 = vector.shape_cast %19 : vector<17x128xf32> to vector<1x17x128xf32>
    tpu.vector_store %arg4[%c2_18, %c0_19, %c0_20], %22 {strides = array<i32>} : memref<4x17x128xf32, #tpu.memory_space<vmem>>, vector<1x17x128xf32>,
    %c3 = arith.constant 3 : index
    %c0_21 = arith.constant 0 : index
    %c0_22 = arith.constant 0 : index
    %23 = vector.load %arg1[%c3, %c0_21, %c0_22] : memref<4x17x64xbf16, #tpu.memory_space<vmem>>, vector<1x17x64xbf16>
    %24 = vector.shape_cast %23 : vector<1x17x64xbf16> to vector<17x64xbf16>
    %cst_23 = arith.constant dense<0.000000e+00> : vector<17x128xf32>
    %25 = tpu.matmul %24, %0, %cst_23 {dimension_numbers = #tpu.dot_dimension_numbers<[1], [0], [0], [1], [0, 0, 1, 1], [], []>} : vector<17x64xbf16>, vector<64x128xbf16>, vector<17x128xf32> -> vector<17x128xf32>
    %26 = arith.addf %25, %1 : vector<17x128xf32>
    %c3_24 = arith.constant 3 : index
    %c0_25 = arith.constant 0 : index
    %c0_26 = arith.constant 0 : index
    %27 = vector.load %arg4[%c3_24, %c0_25, %c0_26] : memref<4x17x128xf32, #tpu.memory_space<vmem>>, vector<1x17x128xf32>
    %28 = vector.shape_cast %27 : vector<1x17x128xf32> to vector<17x128xf32>
    %29 = vector.shape_cast %26 : vector<17x128xf32> to vector<1x17x128xf32>
    tpu.vector_store %arg4[%c3_24, %c0_25, %c0_26], %29 {strides = array<i32>} : memref<4x17x128xf32, #tpu.memory_space<vmem>>, vector<1x17x128xf32>,
    return
  }
  func.func @transform_0(%arg0: i32) -> (i32, i32, i32) {
    %c0_i32 = arith.constant 0 : i32
    %c0_i32_0 = arith.constant 0 : i32
    %c0_i32_1 = arith.constant 0 : i32
    return %arg0, %c0_i32, %c0_i32_0 : i32, i32, i32
  }
  func.func @transform_1(%arg0: i32) -> (i32, i32) {
    %c0_i32 = arith.constant 0 : i32
    %c0_i32_0 = arith.constant 0 : i32
    %c0_i32_1 = arith.constant 0 : i32
    return %c0_i32, %c0_i32_0 : i32, i32
  }
  func.func @transform_2(%arg0: i32) -> (i32, i32) {
    %c0_i32 = arith.constant 0 : i32
    %c0_i32_0 = arith.constant 0 : i32
    %c0_i32_1 = arith.constant 0 : i32
    return %c0_i32, %c0_i32_0 : i32, i32
  }
  func.func @transform_3(%arg0: i32) -> (i32, i32, i32) {
    %c0_i32 = arith.constant 0 : i32
    %c0_i32_0 = arith.constant 0 : i32
    %c0_i32_1 = arith.constant 0 : i32
    return %arg0, %c0_i32, %c0_i32_0 : i32, i32, i32
  }
}

</mosaic_0001>

<llo_original>
// kernel: patch_embedding.1
$region0: #{patch_embedding.1}
  #allocation0 [shape = 'u32[]', space=smem, size = 0x4, offset = 0x4, fixed_abs, tag = 'smem constant byte address 0x4 - core index']
  #allocation1 [shape = 'u32[144,128]{1,0:T(1,128)}', space=vmem, size = 0x12000, scoped, tag = 'internal scratch']
  %s0 = inlined_call_operand.vmem [shape: bf16[8,17,64], index: 0, kind: input, shape index: {}]
  %s1 = inlined_call_operand.vmem [shape: bf16[64,128], index: 1, kind: input, shape index: {}]
  %s2 = inlined_call_operand.vmem [shape: f32[17,128], index: 2, kind: input, shape index: {}]
  %s3 = inlined_call_operand.vmem [shape: f32[8,17,128], index: 3, kind: output, shape index: {}]
  %s4 = sld [smem:[#allocation0]]
  $region45: #{patch_embedding.1} parent=0
    _
  %s6 = ssub.s32 1, %s4
  %s7 = scalar_select 0, %s6, %s4
  loop: start=0, step=1, limit=4
  $region2: #{patch_embedding.1} parent=0 // loop_pre_header
    _
  $region3: #{patch_embedding.1} parent=0 // loop_header
    %s9 = sphi 0, %s13
    %p10 = scmp.ge.s32.totalorder %s9, 4
    %s19 = sphi 0, %s21
    %s22 = sphi 0, %s19
    %s23 = sphi 0, %s22
    %s39 = sphi 0, %s23
    %s43 = sphi 0, %s43
    %s45 = sphi 0, %s43
    %s46 = sphi 0, %s45
    %s60 = sphi 0, %s46
    %s64 = sphi 0, %s64
    %s66 = sphi 0, %s64
    %s67 = sphi 0, %s66
    %s81 = sphi 0, %s67
    %s87 = sphi 0, %s89
    %s90 = sphi 0, %s87
    %s91 = sphi 0, %s90
    %s107 = sphi 0, %s91
  $region4: #{patch_embedding.1} parent=0 // loop_header_branch
    %12 = sbr.rel (%p10) target = $region8
  $region5: #{patch_embedding.1} parent=0 // loop_body
    %s14 = ssub.s32 %s9, 1
    %s15 = ssub.s32 %s9, 2
    %s16 = sadd.s32 %s9, 1
    %s17 = ssub.s32 %s9, %s16
    %p18 = scmp.eq.s32.totalorder %s17, 0
    %s20 = sadd.s32 %s19, 1
    %s21 = scalar_select %p18, %s19, %s20
    %p24 = pneg %p18
    %p25 = scmp.eq.s32.totalorder %s9, 1
    %p26 = por %p24, %p25
    %p27 = scmp.ne.s32.totalorder %s19, %s22
    %p28 = scmp.eq.s32.totalorder %s9, 0
    %p29 = por %p27, %p28
    %p30 = scmp.ne.s32.totalorder %s19, %s22
    %p31 = scmp.eq.s32.totalorder %s14, 1
    %p32 = por %p30, %p31
    %p33 = scmp.ne.s32.totalorder %s22, %s23
    %p34 = scmp.eq.s32.totalorder %s14, 0
    %p35 = por %p33, %p34
    %p36 = scmp.ne.s32.totalorder %s22, %s23
    %p37 = scmp.eq.s32.totalorder %s15, 1
    %p38 = por %p36, %p37
    %p40 = scmp.ne.s32.totalorder %s23, %s39
    %p41 = scmp.eq.s32.totalorder %s15, 0
    %p42 = por %p40, %p41
    %s44 = sadd.s32 %s43, 1
    %p47 = scmp.eq.s32.totalorder %s9, 1
    %p48 = scmp.ne.s32.totalorder %s43, %s45
    %p49 = scmp.eq.s32.totalorder %s9, 0
    %p50 = por %p48, %p49
    %p51 = scmp.ne.s32.totalorder %s43, %s45
    %p52 = scmp.eq.s32.totalorder %s14, 1
    %p53 = por %p51, %p52
    %p54 = scmp.ne.s32.totalorder %s45, %s46
    %p55 = scmp.eq.s32.totalorder %s14, 0
    %p56 = por %p54, %p55
    %p57 = scmp.ne.s32.totalorder %s45, %s46
    %p58 = scmp.eq.s32.totalorder %s15, 1
    %p59 = por %p57, %p58
    %p61 = scmp.ne.s32.totalorder %s46, %s60
    %p62 = scmp.eq.s32.totalorder %s15, 0
    %p63 = por %p61, %p62
    %s65 = sadd.s32 %s64, 1
    %p68 = scmp.eq.s32.totalorder %s9, 1
    %p69 = scmp.ne.s32.totalorder %s64, %s66
    %p70 = scmp.eq.s32.totalorder %s9, 0
    %p71 = por %p69, %p70
    %p72 = scmp.ne.s32.totalorder %s64, %s66
    %p73 = scmp.eq.s32.totalorder %s14, 1
    %p74 = por %p72, %p73
    %p75 = scmp.ne.s32.totalorder %s66, %s67
    %p76 = scmp.eq.s32.totalorder %s14, 0
    %p77 = por %p75, %p76
    %p78 = scmp.ne.s32.totalorder %s66, %s67
    %p79 = scmp.eq.s32.totalorder %s15, 1
    %p80 = por %p78, %p79
    %p82 = scmp.ne.s32.totalorder %s67, %s81
    %p83 = scmp.eq.s32.totalorder %s15, 0
    %p84 = por %p82, %p83
    %s85 = ssub.s32 %s9, %s16
    %p86 = scmp.eq.s32.totalorder %s85, 0
    %s88 = sadd.s32 %s87, 1
    %s89 = scalar_select %p86, %s87, %s88
    %p92 = pneg %p86
    %p93 = scmp.eq.s32.totalorder %s9, 1
    %p94 = por %p92, %p93
    %p95 = scmp.ne.s32.totalorder %s87, %s90
    %p96 = scmp.eq.s32.totalorder %s9, 0
    %p97 = por %p95, %p96
    %p98 = scmp.ne.s32.totalorder %s87, %s90
    %p99 = scmp.eq.s32.totalorder %s14, 1
    %p100 = por %p98, %p99
    %p101 = scmp.ne.s32.totalorder %s90, %s91
    %p102 = scmp.eq.s32.totalorder %s14, 0
    %p103 = por %p101, %p102
    %p104 = scmp.ne.s32.totalorder %s90, %s91
    %p105 = scmp.eq.s32.totalorder %s15, 1
    %p106 = por %p104, %p105
    %p108 = scmp.ne.s32.totalorder %s91, %s107
    %p109 = scmp.eq.s32.totalorder %s15, 0
    %p110 = por %p108, %p109
    %p111 = scmp.le.s32.totalorder 1, %s9
    %p112 = scmp.lt.s32.totalorder %s9, 3
    %p113 = pnand %p111, %p112
    %p114 = pneg %p113
    // Predicated region
    $region9: #{patch_embedding.1} parent=5 // pred_check
      _
    $region10: #{patch_embedding.1} parent=5 // pred_check_branch
      %116 = sbr.rel (%p113) target = $region12
    $region11: #{patch_embedding.1} parent=5 // pred_region
      %s117 = ssub.s32 %s9, 1
      // Predicated region
      $region13: #{patch_embedding.1} parent=11 // pred_check
        %p118 = pneg %p56
      $region14: #{patch_embedding.1} parent=11 // pred_check_branch
        %120 = sbr.rel (%p118) target = $region16
      $region15: #{patch_embedding.1} parent=11 // pred_region
        _
      $region16: #{patch_embedding.1} parent=11 // pred_fallthru
        _
      // Predicated region
      $region17: #{patch_embedding.1} parent=11 // pred_check
        %p121 = pneg %p77
      $region18: #{patch_embedding.1} parent=11 // pred_check_branch
        %123 = sbr.rel (%p121) target = $region20
      $region19: #{patch_embedding.1} parent=11 // pred_region
        _
      $region20: #{patch_embedding.1} parent=11 // pred_fallthru
        _
    $region12: #{patch_embedding.1} parent=5 // pred_fallthru
      _
    %p124 = scmp.lt.s32.totalorder %s9, 2
    // Predicated region
    $region21: #{patch_embedding.1} parent=5 // pred_check
      %p125 = pneg %p124
    $region22: #{patch_embedding.1} parent=5 // pred_check_branch
      %127 = sbr.rel (%p125) target = $region24
    $region23: #{patch_embedding.1} parent=5 // pred_region
      // Predicated region
      $region25: #{patch_embedding.1} parent=23 // pred_check
        %p128 = pneg %p29
      $region26: #{patch_embedding.1} parent=23 // pred_check_branch
        %130 = sbr.rel (%p128) target = $region28
      $region27: #{patch_embedding.1} parent=23 // pred_region
        %s131 = smul.u32 4, %s9
        %p132 = scmp.lt.s32.totalorder %s131, 7
        %s133 = scalar_select %p132, %s131, 7
        %s134 = smul.addr %s133, 3
        %s135 = smul.addr %s134, 4
        %s136 = scalar_lea.vmem %s0, %s135
        %s137 = smul.u32 4, %s9
      $region28: #{patch_embedding.1} parent=23 // pred_fallthru
        _
    $region24: #{patch_embedding.1} parent=5 // pred_fallthru
      _
    %p138 = scmp.le.s32.totalorder 1, %s9
    %p139 = scmp.lt.s32.totalorder %s9, 3
    %p140 = pnand %p138, %p139
    %p141 = pneg %p140
    // Predicated region
    $region29: #{patch_embedding.1} parent=5 // pred_check
      _
    $region30: #{patch_embedding.1} parent=5 // pred_check_branch
      %143 = sbr.rel (%p140) target = $region32
    $region31: #{patch_embedding.1} parent=5 // pred_region
      %s144 = ssub.s32 %s9, 1
      %s145 = smul.u32 4, %s14
      %p146 = scmp.lt.s32.totalorder %s145, 7
      %s147 = scalar_select %p146, %s145, 7
      %s148 = smul.addr %s147, 3
      %s149 = smul.addr %s148, 4
      %s150 = scalar_lea.vmem %s0, %s149
      %p151 = pneg %p35
      %p152 = pneg %p32
      %p153 = pneg %p56
      %p154 = pneg %p53
      %p155 = pneg %p77
      %p156 = pneg %p74
      %p157 = pneg %p103
      %p158 = pneg %p100
      %s159 = smul.u32 4, %s14
      %p160 = scmp.lt.s32.totalorder %s159, 7
      %s161 = scalar_select %p160, %s159, 7
      %s162 = smul.addr %s161, 3
      %s163 = smul.addr %s162, 8
      %s164 = scalar_lea.vmem %s3, %s163
      %s165 = smul.u32 4, %s14
      %p166 = scmp.lt.s32.totalorder %s165, 7
      %s167 = scalar_select %p166, %s165, 7
      %s168 = smul.addr %s167, 3
      %s169 = smul.addr %s168, 4
      %s170 = scalar_lea.vmem %s0, %s169
      %s171 = smul.u32 4, %s14
      %s172 = smul.u32 4, %s14
      %p173 = scmp.lt.s32.totalorder %s172, 7
      %s174 = scalar_select %p173, %s172, 7
      %s175 = smul.addr %s174, 3
      %s176 = smul.addr %s175, 8
      %s177 = scalar_lea.vmem %s3, %s176
      %s178 = smul.u32 4, %s14
      %v180 = vld [vmem:[%s1] sm:$0xf]
      %v181 = vld [vmem:[%s1 + $0x4] sm:$0xf]
      %v182 = vld [vmem:[%s1 + $0x8] sm:$0xf]
      %v183 = vld [vmem:[%s1 + $0xc] sm:$0xf]
      %v184 = vld [vmem:[%s1 + $0x10] sm:$0xf]
      %v185 = vld [vmem:[%s1 + $0x14] sm:$0xf]
      %v186 = vld [vmem:[%s1 + $0x18] sm:$0xf]
      %v187 = vld [vmem:[%s1 + $0x1c] sm:$0xf]
      %v188 = vld [vmem:[%s2] sm:$0xff]
      %v189 = vld [vmem:[%s2 + $0x8] sm:$0xff]
      %v190 = vld [vmem:[%s2 + $0x10] sm:$0x1]
      %v191 = vld [vmem:[%s170] sm:$0xf]
      %v192 = vld [vmem:[%s170 + $0x4] sm:$0xf]
      %v193 = vld [vmem:[%s170 + $0x8] sm:$0x1]
      %v197 = vunpack.c.l.b16 %v191
      %v198 = vunpack.c.l.b16 %v192
      %v199 = vunpack.c.l.b16 %v193
      %v200 = vpack.c.b16 %v198, %v197
      %v201 = vpack.c.b16 %v199, %v199
      %v210 = vunpack.c.l.b16 %v180
      %v211 = vunpack.c.l.b16 %v181
      %v212 = vunpack.c.l.b16 %v182
      %v213 = vunpack.c.l.b16 %v183
      %v214 = vunpack.c.l.b16 %v184
      %v215 = vunpack.c.l.b16 %v185
      %v216 = vunpack.c.l.b16 %v186
      %v217 = vunpack.c.l.b16 %v187
      %v218 = vpack.c.b16 %v211, %v210
      %v219 = vpack.c.b16 %v213, %v212
      %v220 = vpack.c.b16 %v215, %v214
      %v221 = vpack.c.b16 %v217, %v216
      %vm226 = vcmask 523264
      %v228 = vsel %vm226, %v200, 0
      %v231 = vsel %vm226, %v201, 0
      %233 = vmatprep.subr.bf16.mxu0 0
      %234 = vmatpush1.bf16.msra.mxu0 %v218
      %235 = vmatprep.subr.bf16.mxu0 0
      %236 = vmatpush1.bf16.msra.mxu0 %v219
      %237 = vmatprep.subr.bf16.mxu0 0
      %238 = vmatpush1.bf16.msra.mxu0 %v220
      %239 = vmatprep.subr.bf16.mxu0 0
      %240 = vmatpush1.bf16.msra.mxu0 %v221
      %241 = vmatprep.subr.bf16.mxu0 0
      %242 = vmatpush1.bf16.msra.mxu0 0
      %243 = vmatprep.subr.bf16.mxu0 0
      %244 = vmatpush1.bf16.msra.mxu0 0
      %245 = vmatprep.subr.bf16.mxu0 0
      %246 = vmatpush1.bf16.msra.mxu0 0
      %247 = vmatprep.subr.bf16.mxu0 0
      %248 = vmatpush1.bf16.msra.mxu0 0
      %249 = vmatprep.subr.bf16.mxu0 0
      %250 = vmatpush1.bf16.msra.mxu0 0
      %251 = vmatprep.subr.bf16.mxu0 0
      %252 = vmatpush1.bf16.msra.mxu0 0
      %253 = vmatprep.subr.bf16.mxu0 0
      %254 = vmatpush1.bf16.msra.mxu0 0
      %255 = vmatprep.subr.bf16.mxu0 0
      %256 = vmatpush1.bf16.msra.mxu0 0
      %257 = vmatprep.subr.bf16.mxu0 0
      %258 = vmatpush1.bf16.msra.mxu0 0
      %259 = vmatprep.subr.bf16.mxu0 0
      %260 = vmatpush1.bf16.msra.mxu0 0
      %261 = vmatprep.subr.bf16.mxu0 0
      %262 = vmatpush1.bf16.msra.mxu0 0
      %263 = vmatprep.subr.bf16.mxu0 0
      %264 = vmatpush1.bf16.msra.mxu0 0
      %265 = vmatprep.mubr.bf16.mxu0 0
      %266 = vmatmul.mubr.bf16.gmra.mrb[0].mxu0 %v228
      %v267 = vpop.f32.mrb[0].mxu0
      %v268 = vadd.f32 %v188, %v267
      %v269 = vpop.f32.mrb[0].mxu0
      %v270 = vpop.f32.mrb[0].mxu0
      %v271 = vadd.f32 %v189, %v270
      %v272 = vpop.f32.mrb[0].mxu0
      %273 = vmatprep.mubr.bf16.mxu0 0
      %274 = vmatmul.mubr.bf16.gmra.mrb[0].mxu0 %v231
      %v275 = vpop.f32.mrb[0].mxu0
      %v276 = vadd.f32 %v190, %v275
      %v277 = vpop.f32.mrb[0].mxu0
      %v278 = vpop.f32.mrb[0].mxu0
      %v279 = vpop.f32.mrb[0].mxu0
      %280 = vdwg.mxu0
      %281 = vst [vmem:[%s177] sm:$0xff] %v268
      %282 = vst [vmem:[%s177 + $0x8] sm:$0xff] %v271
      %283 = vst [vmem:[%s177 + $0x10] sm:$0x1] %v276
      %s284 = scalar_lea.vmem %s170, 12
      %v285 = vld [vmem:[%s284] sm:$0xf]
      %v286 = vld [vmem:[%s284 + $0x4] sm:$0xf]
      %v287 = vld [vmem:[%s284 + $0x8] sm:$0x1]
      %v291 = vunpack.c.l.b16 %v285
      %v292 = vunpack.c.l.b16 %v286
      %v293 = vunpack.c.l.b16 %v287
      %v294 = vpack.c.b16 %v292, %v291
      %v295 = vpack.c.b16 %v293, %v293
      %v297 = vsel %vm226, %v294, 0
      %v300 = vsel %vm226, %v295, 0
      %302 = vmatprep.subr.bf16.mxu0 0
      %303 = vmatpush1.bf16.msra.mxu0 %v218
      %304 = vmatprep.subr.bf16.mxu0 0
      %305 = vmatpush1.bf16.msra.mxu0 %v219
      %306 = vmatprep.subr.bf16.mxu0 0
      %307 = vmatpush1.bf16.msra.mxu0 %v220
      %308 = vmatprep.subr.bf16.mxu0 0
      %309 = vmatpush1.bf16.msra.mxu0 %v221
      %310 = vmatprep.subr.bf16.mxu0 0
      %311 = vmatpush1.bf16.msra.mxu0 0
      %312 = vmatprep.subr.bf16.mxu0 0
      %313 = vmatpush1.bf16.msra.mxu0 0
      %314 = vmatprep.subr.bf16.mxu0 0
      %315 = vmatpush1.bf16.msra.mxu0 0
      %316 = vmatprep.subr.bf16.mxu0 0
      %317 = vmatpush1.bf16.msra.mxu0 0
      %318 = vmatprep.subr.bf16.mxu0 0
      %319 = vmatpush1.bf16.msra.mxu0 0
      %320 = vmatprep.subr.bf16.mxu0 0
      %321 = vmatpush1.bf16.msra.mxu0 0
      %322 = vmatprep.subr.bf16.mxu0 0
      %323 = vmatpush1.bf16.msra.mxu0 0
      %324 = vmatprep.subr.bf16.mxu0 0
      %325 = vmatpush1.bf16.msra.mxu0 0
      %326 = vmatprep.subr.bf16.mxu0 0
      %327 = vmatpush1.bf16.msra.mxu0 0
      %328 = vmatprep.subr.bf16.mxu0 0
      %329 = vmatpush1.bf16.msra.mxu0 0
      %330 = vmatprep.subr.bf16.mxu0 0
      %331 = vmatpush1.bf16.msra.mxu0 0
      %332 = vmatprep.subr.bf16.mxu0 0
      %333 = vmatpush1.bf16.msra.mxu0 0
      %334 = vmatprep.mubr.bf16.mxu0 0
      %335 = vmatmul.mubr.bf16.gmra.mrb[0].mxu0 %v297
      %v336 = vpop.f32.mrb[0].mxu0
      %v337 = vadd.f32 %v188, %v336
      %v338 = vpop.f32.mrb[0].mxu0
      %v339 = vpop.f32.mrb[0].mxu0
      %v340 = vadd.f32 %v189, %v339
      %v341 = vpop.f32.mrb[0].mxu0
      %342 = vmatprep.mubr.bf16.mxu0 0
      %343 = vmatmul.mubr.bf16.gmra.mrb[0].mxu0 %v300
      %v344 = vpop.f32.mrb[0].mxu0
      %v345 = vadd.f32 %v190, %v344
      %v346 = vpop.f32.mrb[0].mxu0
      %v347 = vpop.f32.mrb[0].mxu0
      %v348 = vpop.f32.mrb[0].mxu0
      %349 = vdwg.mxu0
      %s350 = scalar_lea.vmem %s177, 24
      %351 = vst [vmem:[%s350] sm:$0xff] %v337
      %352 = vst [vmem:[%s350 + $0x8] sm:$0xff] %v340
      %353 = vst [vmem:[%s350 + $0x10] sm:$0x1] %v345
      %s354 = scalar_lea.vmem %s170, 24
      %v355 = vld [vmem:[%s354] sm:$0xf]
      %v356 = vld [vmem:[%s354 + $0x4] sm:$0xf]
      %v357 = vld [vmem:[%s354 + $0x8] sm:$0x1]
      %v361 = vunpack.c.l.b16 %v355
      %v362 = vunpack.c.l.b16 %v356
      %v363 = vunpack.c.l.b16 %v357
      %v364 = vpack.c.b16 %v362, %v361
      %v365 = vpack.c.b16 %v363, %v363
      %v367 = vsel %vm226, %v364, 0
      %v370 = vsel %vm226, %v365, 0
      %372 = vmatprep.subr.bf16.mxu0 0
      %373 = vmatpush1.bf16.msra.mxu0 %v218
      %374 = vmatprep.subr.bf16.mxu0 0
      %375 = vmatpush1.bf16.msra.mxu0 %v219
      %376 = vmatprep.subr.bf16.mxu0 0
      %377 = vmatpush1.bf16.msra.mxu0 %v220
      %378 = vmatprep.subr.bf16.mxu0 0
      %379 = vmatpush1.bf16.msra.mxu0 %v221
      %380 = vmatprep.subr.bf16.mxu0 0
      %381 = vmatpush1.bf16.msra.mxu0 0
      %382 = vmatprep.subr.bf16.mxu0 0
      %383 = vmatpush1.bf16.msra.mxu0 0
      %384 = vmatprep.subr.bf16.mxu0 0
      %385 = vmatpush1.bf16.msra.mxu0 0
      %386 = vmatprep.subr.bf16.mxu0 0
      %387 = vmatpush1.bf16.msra.mxu0 0
      %388 = vmatprep.subr.bf16.mxu0 0
      %389 = vmatpush1.bf16.msra.mxu0 0
      %390 = vmatprep.subr.bf16.mxu0 0
      %391 = vmatpush1.bf16.msra.mxu0 0
      %392 = vmatprep.subr.bf16.mxu0 0
      %393 = vmatpush1.bf16.msra.mxu0 0
      %394 = vmatprep.subr.bf16.mxu0 0
      %395 = vmatpush1.bf16.msra.mxu0 0
      %396 = vmatprep.subr.bf16.mxu0 0
      %397 = vmatpush1.bf16.msra.mxu0 0
      %398 = vmatprep.subr.bf16.mxu0 0
      %399 = vmatpush1.bf16.msra.mxu0 0
      %400 = vmatprep.subr.bf16.mxu0 0
      %401 = vmatpush1.bf16.msra.mxu0 0
      %402 = vmatprep.subr.bf16.mxu0 0
      %403 = vmatpush1.bf16.msra.mxu0 0
      %404 = vmatprep.mubr.bf16.mxu0 0
      %405 = vmatmul.mubr.bf16.gmra.mrb[0].mxu0 %v367
      %v406 = vpop.f32.mrb[0].mxu0
      %v407 = vadd.f32 %v188, %v406
      %v408 = vpop.f32.mrb[0].mxu0
      %v409 = vpop.f32.mrb[0].mxu0
      %v410 = vadd.f32 %v189, %v409
      %v411 = vpop.f32.mrb[0].mxu0
      %412 = vmatprep.mubr.bf16.mxu0 0
      %413 = vmatmul.mubr.bf16.gmra.mrb[0].mxu0 %v370
      %v414 = vpop.f32.mrb[0].mxu0
      %v415 = vadd.f32 %v190, %v414
      %v416 = vpop.f32.mrb[0].mxu0
      %v417 = vpop.f32.mrb[0].mxu0
      %v418 = vpop.f32.mrb[0].mxu0
      %419 = vdwg.mxu0
      %s420 = scalar_lea.vmem %s177, 48
      %421 = vst [vmem:[%s420] sm:$0xff] %v407
      %422 = vst [vmem:[%s420 + $0x8] sm:$0xff] %v410
      %423 = vst [vmem:[%s420 + $0x10] sm:$0x1] %v415
      %s424 = scalar_lea.vmem %s170, 36
      %v425 = vld [vmem:[%s424] sm:$0xf]
      %v426 = vld [vmem:[%s424 + $0x4] sm:$0xf]
      %v427 = vld [vmem:[%s424 + $0x8] sm:$0x1]
      %v431 = vunpack.c.l.b16 %v425
      %v432 = vunpack.c.l.b16 %v426
      %v433 = vunpack.c.l.b16 %v427
      %v434 = vpack.c.b16 %v432, %v431
      %v435 = vpack.c.b16 %v433, %v433
      %v437 = vsel %vm226, %v434, 0
      %v440 = vsel %vm226, %v435, 0
      %442 = vmatprep.subr.bf16.mxu0 0
      %443 = vmatpush1.bf16.msra.mxu0 %v218
      %444 = vmatprep.subr.bf16.mxu0 0
      %445 = vmatpush1.bf16.msra.mxu0 %v219
      %446 = vmatprep.subr.bf16.mxu0 0
      %447 = vmatpush1.bf16.msra.mxu0 %v220
      %448 = vmatprep.subr.bf16.mxu0 0
      %449 = vmatpush1.bf16.msra.mxu0 %v221
      %450 = vmatprep.subr.bf16.mxu0 0
      %451 = vmatpush1.bf16.msra.mxu0 0
      %452 = vmatprep.subr.bf16.mxu0 0
      %453 = vmatpush1.bf16.msra.mxu0 0
      %454 = vmatprep.subr.bf16.mxu0 0
      %455 = vmatpush1.bf16.msra.mxu0 0
      %456 = vmatprep.subr.bf16.mxu0 0
      %457 = vmatpush1.bf16.msra.mxu0 0
      %458 = vmatprep.subr.bf16.mxu0 0
      %459 = vmatpush1.bf16.msra.mxu0 0
      %460 = vmatprep.subr.bf16.mxu0 0
      %461 = vmatpush1.bf16.msra.mxu0 0
      %462 = vmatprep.subr.bf16.mxu0 0
      %463 = vmatpush1.bf16.msra.mxu0 0
      %464 = vmatprep.subr.bf16.mxu0 0
      %465 = vmatpush1.bf16.msra.mxu0 0
      %466 = vmatprep.subr.bf16.mxu0 0
      %467 = vmatpush1.bf16.msra.mxu0 0
      %468 = vmatprep.subr.bf16.mxu0 0
      %469 = vmatpush1.bf16.msra.mxu0 0
      %470 = vmatprep.subr.bf16.mxu0 0
      %471 = vmatpush1.bf16.msra.mxu0 0
      %472 = vmatprep.subr.bf16.mxu0 0
      %473 = vmatpush1.bf16.msra.mxu0 0
      %474 = vmatprep.mubr.bf16.mxu0 0
      %475 = vmatmul.mubr.bf16.gmra.mrb[0].mxu0 %v437
      %v476 = vpop.f32.mrb[0].mxu0
      %v477 = vadd.f32 %v188, %v476
      %v478 = vpop.f32.mrb[0].mxu0
      %v479 = vpop.f32.mrb[0].mxu0
      %v480 = vadd.f32 %v189, %v479
      %v481 = vpop.f32.mrb[0].mxu0
      %482 = vmatprep.mubr.bf16.mxu0 0
      %483 = vmatmul.mubr.bf16.gmra.mrb[0].mxu0 %v440
      %v484 = vpop.f32.mrb[0].mxu0
      %v485 = vadd.f32 %v190, %v484
      %v486 = vpop.f32.mrb[0].mxu0
      %v487 = vpop.f32.mrb[0].mxu0
      %v488 = vpop.f32.mrb[0].mxu0
      %489 = vdwg.mxu0
      %s490 = scalar_lea.vmem %s177, 72
      %491 = vst [vmem:[%s490] sm:$0xff] %v477
      %492 = vst [vmem:[%s490 + $0x8] sm:$0xff] %v480
      %493 = vst [vmem:[%s490 + $0x10] sm:$0x1] %v485
      %s494 = smul.u32 4, %s14
      %p495 = scmp.lt.s32.totalorder %s494, 7
      %s496 = scalar_select %p495, %s494, 7
      %s497 = smul.addr %s496, 3
      %s498 = smul.addr %s497, 8
      %s499 = scalar_lea.vmem %s3, %s498
      // Predicated region
      $region33: #{patch_embedding.1} parent=31 // pred_check
        %p500 = pneg %p100
      $region34: #{patch_embedding.1} parent=31 // pred_check_branch
        %502 = sbr.rel (%p500) target = $region36
      $region35: #{patch_embedding.1} parent=31 // pred_region
        %s503 = smul.u32 4, %s14
      $region36: #{patch_embedding.1} parent=31 // pred_fallthru
        _
    $region32: #{patch_embedding.1} parent=5 // pred_fallthru
      _
    %p504 = scmp.le.s32.totalorder 2, %s9
    // Predicated region
    $region37: #{patch_embedding.1} parent=5 // pred_check
      %p505 = pneg %p504
    $region38: #{patch_embedding.1} parent=5 // pred_check_branch
      %507 = sbr.rel (%p505) target = $region40
    $region39: #{patch_embedding.1} parent=5 // pred_region
      %s508 = ssub.s32 %s9, 2
      // Predicated region
      $region41: #{patch_embedding.1} parent=39 // pred_check
        %p509 = pneg %p106
      $region42: #{patch_embedding.1} parent=39 // pred_check_branch
        %511 = sbr.rel (%p509) target = $region44
      $region43: #{patch_embedding.1} parent=39 // pred_region
        %s512 = smul.u32 4, %s15
        %p513 = scmp.lt.s32.totalorder %s512, 7
        %s514 = scalar_select %p513, %s512, 7
        %s515 = smul.addr %s514, 3
        %s516 = smul.addr %s515, 8
        %s517 = scalar_lea.vmem %s3, %s516
      $region44: #{patch_embedding.1} parent=39 // pred_fallthru
        _
    $region40: #{patch_embedding.1} parent=5 // pred_fallthru
      _
  $region6: #{patch_embedding.1} parent=0 // loop_footer
    %s13 = sadd.s32 1, %s9
  $region7: #{patch_embedding.1} parent=0 // loop_footer_branch
    %8 = sbr.rel target = $region3
  $region8: #{patch_embedding.1} parent=0 // loop_exit
    _

</llo_original>
